<compile_context>
chip_gen: v7x
topology: tpu7x:2x2x1
jax: 0.10.0
libtpu: 0.0.40
codegen_flags: <defaults>
</compile_context>

<pallas_src>
import functools

import jax
import jax.numpy as jnp
from jax.experimental import pallas as pl
from jax.experimental.pallas import tpu as pltpu

INPUT_DIM = 100
HIDDEN_DIM = 128
OUTPUT_DIM = 6
PAD_OUT = 8     # output lanes: 6 -> 8 (== full last dim of the out array; tiny masked stores)


def _round_up(n, m):
    return ((n + m - 1) // m) * m


def _mlp_kernel(x_ref, w1_ref, b1_ref, w2_ref, b2_ref, w3_ref, b3_ref, o_ref):
    # Whole 3-layer MLP for one batch tile stays resident in VMEM / vregs; f32 accumulation.
    x = x_ref[...].astype(w1_ref.dtype)
    h1 = jnp.dot(x, w1_ref[...], preferred_element_type=jnp.float32) + b1_ref[...]
    h1 = jnp.maximum(h1, 0.0)
    h2 = jnp.dot(h1.astype(w2_ref.dtype), w2_ref[...],
                 preferred_element_type=jnp.float32) + b2_ref[...]
    h2 = jnp.maximum(h2, 0.0)
    y = jnp.dot(h2.astype(w3_ref.dtype), w3_ref[...],
                preferred_element_type=jnp.float32) + b3_ref[...]
    o_ref[...] = y.astype(o_ref.dtype)


@functools.partial(jax.jit, static_argnames=("tile_b", "num_cores"))
def generator_forward(x, params, tile_b=2048, num_cores=1):
    """x: (B, INPUT_DIM) -> (B, OUTPUT_DIM) float32. Matmul operand dtype follows the weights."""
    w1, b1, w2, b2, w3, b3 = params
    B, D = x.shape
    assert D == INPUT_DIM

    # Pad only the tiny layer-3 weight/bias along N (6 -> 8). x and the batch are NOT padded.
    w3_p = jnp.pad(w3, ((0, 0), (0, PAD_OUT - w3.shape[1])))   # (128, 8)
    b3_p = jnp.pad(b3, ((0, 0), (0, PAD_OUT - b3.shape[1])))   # (1, 8)

    # --- static batch-tile selection ---
    if B <= 8:
        tb = B                                    # one block == full dim (legal for any B)
    else:
        tb_max = (B // 8) * 8                     # largest multiple of 8 not exceeding B
        if num_cores > 1 and B >= 16 * num_cores:
            # Multi-TensorCore chip (v7x): split batch across cores via the "parallel" grid.
            per_core = _round_up(pl.cdiv(B, num_cores), 8)
            tb = max(8, min(tile_b, per_core, tb_max))
        else:
            # Single-TC chip (v5e/v6e): one big tile, per-step overhead amortized.
            tb = max(8, min(tile_b, tb_max))
    grid = (pl.cdiv(B, tb),)                      # last block may be partial; Pallas masks it

    wspec = lambda shape: pl.BlockSpec(shape, lambda i: (0, 0))   # resident weights/biases

    out = pl.pallas_call(
        _mlp_kernel,
        out_shape=jax.ShapeDtypeStruct((B, PAD_OUT), jnp.float32),
        grid=grid,
        in_specs=[
            pl.BlockSpec((tb, INPUT_DIM), lambda i: (i, 0)),   # x tile, raw (no pad/cast pass)
            wspec((INPUT_DIM, HIDDEN_DIM)),                    # w1 (100, 128)
            wspec((1, HIDDEN_DIM)),                            # b1
            wspec((HIDDEN_DIM, HIDDEN_DIM)),                   # w2 (128, 128)
            wspec((1, HIDDEN_DIM)),                            # b2
            wspec((HIDDEN_DIM, PAD_OUT)),                      # w3 (128, 8)
            wspec((1, PAD_OUT)),                               # b3 (1, 8)
        ],
        out_specs=pl.BlockSpec((tb, PAD_OUT), lambda i: (i, 0)),
        compiler_params=pltpu.CompilerParams(
            dimension_semantics=("parallel",),
        ),
    )(x, w1, b1, w2, b2, w3_p, b3_p)

    return out[:, :OUTPUT_DIM]


def cast_params_bf16(params):
    """Optional one-time weight cast (bf16 MXU operands; biases & accumulation stay f32).
    Note: bf16 operands will not meet 1e-4 tolerance vs the f32 reference."""
    w1, b1, w2, b2, w3, b3 = params
    return (w1.astype(jnp.bfloat16), b1,
            w2.astype(jnp.bfloat16), b2,
            w3.astype(jnp.bfloat16), b3)


def _detect_num_cores():
    """Best-effort TensorCores-per-device detection (1 on v5e/v6e, 2 on v7x)."""
    try:
        d = jax.devices()[0]
        n = getattr(d, "num_cores", None) or getattr(d, "core_count", None)
        n = int(n) if n else 1
    except Exception:
        n = 1
    return max(1, min(n, 8))


def init_params(key):
    """Deterministic init mimicking torch.nn.Linear default (U[-1/sqrt(fan_in), 1/sqrt(fan_in)])."""
    def linear(k, fan_in, fan_out):
        kw, kb = jax.random.split(k)
        bound = 1.0 / jnp.sqrt(fan_in)
        w = jax.random.uniform(kw, (fan_in, fan_out), jnp.float32, -bound, bound)
        b = jax.random.uniform(kb, (1, fan_out), jnp.float32, -bound, bound)
        return w, b

    k1, k2, k3 = jax.random.split(key, 3)
    w1, b1 = linear(k1, INPUT_DIM, HIDDEN_DIM)
    w2, b2 = linear(k2, HIDDEN_DIM, HIDDEN_DIM)
    w3, b3 = linear(k3, HIDDEN_DIM, OUTPUT_DIM)
    return (w1, b1, w2, b2, w3, b3)


def reference_forward(x, params):
    w1, b1, w2, b2, w3, b3 = params
    h = jnp.maximum(x @ w1 + b1, 0.0)
    h = jnp.maximum(h @ w2 + b2, 0.0)
    return h @ w3 + b3


if __name__ == "__main__":
    key = jax.random.PRNGKey(0)
    kp, kx1, kx2 = jax.random.split(key, 3)
    params = init_params(kp)
    ncores = _detect_num_cores()

    # Small batch: single full-array block.
    B1 = 8
    x1 = jax.random.normal(kx1, (B1, INPUT_DIM), jnp.float32)
    out1 = jax.block_until_ready(generator_forward(x1, params, num_cores=ncores))
    ref1 = reference_forward(x1, params)
    assert out1.shape == (B1, OUTPUT_DIM)
    assert jnp.allclose(out1, ref1, atol=1e-4, rtol=1e-4)

    # Non-multiple-of-8 batch: exercises partial last block + multi-step "parallel" grid.
    B2 = 201
    x2 = jax.random.normal(kx2, (B2, INPUT_DIM), jnp.float32)
    out2 = jax.block_until_ready(generator_forward(x2, params, num_cores=ncores))
    ref2 = reference_forward(x2, params)
    assert out2.shape == (B2, OUTPUT_DIM)
    assert jnp.allclose(out2, ref2, atol=1e-4, rtol=1e-4)

    print("KERNEL_OK")
</pallas_src>

<mosaic_0001>
module attributes {stable_mosaic.version = 11 : i64} {
  func.func @_mlp_kernel(%arg0: i32, %arg1: memref<8x100xf32, #tpu.memory_space<vmem>>, %arg2: memref<100x128xf32, #tpu.memory_space<vmem>>, %arg3: memref<1x128xf32, #tpu.memory_space<vmem>>, %arg4: memref<128x128xf32, #tpu.memory_space<vmem>>, %arg5: memref<1x128xf32, #tpu.memory_space<vmem>>, %arg6: memref<128x8xf32, #tpu.memory_space<vmem>>, %arg7: memref<1x8xf32, #tpu.memory_space<vmem>>, %arg8: memref<8x8xf32, #tpu.memory_space<vmem>>) attributes {dimension_semantics = [#tpu.dimension_semantics<parallel>], iteration_bounds = array<i64: 1>, scalar_prefetch = 0 : i64, scratch_operands = 0 : i64, tpu.core_type = #tpu.core_type<tc>, window_params = [{transform_indices = @transform_0, window_bounds = array<i64: 8, 100>}, {pipeline_mode = #tpu.pipeline_mode<synchronous>, transform_indices = @transform_1, window_bounds = array<i64: 100, 128>}, {pipeline_mode = #tpu.pipeline_mode<synchronous>, transform_indices = @transform_2, window_bounds = array<i64: 1, 128>}, {pipeline_mode = #tpu.pipeline_mode<synchronous>, transform_indices = @transform_3, window_bounds = array<i64: 128, 128>}, {pipeline_mode = #tpu.pipeline_mode<synchronous>, transform_indices = @transform_4, window_bounds = array<i64: 1, 128>}, {pipeline_mode = #tpu.pipeline_mode<synchronous>, transform_indices = @transform_5, window_bounds = array<i64: 128, 8>}, {pipeline_mode = #tpu.pipeline_mode<synchronous>, transform_indices = @transform_6, window_bounds = array<i64: 1, 8>}, {transform_indices = @transform_7, window_bounds = array<i64: 8, 8>}]} {
    %c0 = arith.constant 0 : index
    %c0_0 = arith.constant 0 : index
    %0 = vector.load %arg1[%c0, %c0_0] : memref<8x100xf32, #tpu.memory_space<vmem>>, vector<8x100xf32>
    %c0_1 = arith.constant 0 : index
    %c0_2 = arith.constant 0 : index
    %1 = vector.load %arg2[%c0_1, %c0_2] : memref<100x128xf32, #tpu.memory_space<vmem>>, vector<100x128xf32>
    %cst = arith.constant dense<0.000000e+00> : vector<8x128xf32>
    %2 = tpu.matmul %0, %1, %cst {dimension_numbers = #tpu.dot_dimension_numbers<[1], [0], [0], [1], [0, 0, 1, 1], [], []>} : vector<8x100xf32>, vector<100x128xf32>, vector<8x128xf32> -> vector<8x128xf32>
    %c0_3 = arith.constant 0 : index
    %c0_4 = arith.constant 0 : index
    %3 = vector.load %arg3[%c0_3, %c0_4] : memref<1x128xf32, #tpu.memory_space<vmem>>, vector<1x128xf32>
    %4 = vector.broadcast %3 : vector<1x128xf32> to vector<8x128xf32>
    %5 = arith.addf %2, %4 : vector<8x128xf32>
    %cst_5 = arith.constant 0.000000e+00 : f32
    %6 = vector.broadcast %cst_5 : f32 to vector<8x128xf32>
    %7 = arith.maximumf %5, %6 : vector<8x128xf32>
    %c0_6 = arith.constant 0 : index
    %c0_7 = arith.constant 0 : index
    %8 = vector.load %arg4[%c0_6, %c0_7] : memref<128x128xf32, #tpu.memory_space<vmem>>, vector<128x128xf32>
    %cst_8 = arith.constant dense<0.000000e+00> : vector<8x128xf32>
    %9 = tpu.matmul %7, %8, %cst_8 {dimension_numbers = #tpu.dot_dimension_numbers<[1], [0], [0], [1], [0, 0, 1, 1], [], []>} : vector<8x128xf32>, vector<128x128xf32>, vector<8x128xf32> -> vector<8x128xf32>
    %c0_9 = arith.constant 0 : index
    %c0_10 = arith.constant 0 : index
    %10 = vector.load %arg5[%c0_9, %c0_10] : memref<1x128xf32, #tpu.memory_space<vmem>>, vector<1x128xf32>
    %11 = vector.broadcast %10 : vector<1x128xf32> to vector<8x128xf32>
    %12 = arith.addf %9, %11 : vector<8x128xf32>
    %cst_11 = arith.constant 0.000000e+00 : f32
    %13 = vector.broadcast %cst_11 : f32 to vector<8x128xf32>
    %14 = arith.maximumf %12, %13 : vector<8x128xf32>
    %c0_12 = arith.constant 0 : index
    %c0_13 = arith.constant 0 : index
    %15 = vector.load %arg6[%c0_12, %c0_13] : memref<128x8xf32, #tpu.memory_space<vmem>>, vector<128x8xf32>
    %cst_14 = arith.constant dense<0.000000e+00> : vector<8x8xf32>
    %16 = tpu.matmul %14, %15, %cst_14 {dimension_numbers = #tpu.dot_dimension_numbers<[1], [0], [0], [1], [0, 0, 1, 1], [], []>} : vector<8x128xf32>, vector<128x8xf32>, vector<8x8xf32> -> vector<8x8xf32>
    %c0_15 = arith.constant 0 : index
    %c0_16 = arith.constant 0 : index
    %17 = vector.load %arg7[%c0_15, %c0_16] : memref<1x8xf32, #tpu.memory_space<vmem>>, vector<1x8xf32>
    %18 = vector.broadcast %17 : vector<1x8xf32> to vector<8x8xf32>
    %19 = arith.addf %16, %18 : vector<8x8xf32>
    %c0_17 = arith.constant 0 : index
    %c0_18 = arith.constant 0 : index
    %20 = vector.load %arg8[%c0_17, %c0_18] : memref<8x8xf32, #tpu.memory_space<vmem>>, vector<8x8xf32>
    tpu.vector_store %arg8[%c0_17, %c0_18], %19 {strides = array<i32>} : memref<8x8xf32, #tpu.memory_space<vmem>>, vector<8x8xf32>,
    return
  }
  func.func @transform_0(%arg0: i32) -> (i32, i32) {
    %c0_i32 = arith.constant 0 : i32
    %c0_i32_0 = arith.constant 0 : i32
    return %arg0, %c0_i32 : i32, i32
  }
  func.func @transform_1(%arg0: i32) -> (i32, i32) {
    %c0_i32 = arith.constant 0 : i32
    %c0_i32_0 = arith.constant 0 : i32
    %c0_i32_1 = arith.constant 0 : i32
    return %c0_i32, %c0_i32_0 : i32, i32
  }
  func.func @transform_2(%arg0: i32) -> (i32, i32) {
    %c0_i32 = arith.constant 0 : i32
    %c0_i32_0 = arith.constant 0 : i32
    %c0_i32_1 = arith.constant 0 : i32
    return %c0_i32, %c0_i32_0 : i32, i32
  }
  func.func @transform_3(%arg0: i32) -> (i32, i32) {
    %c0_i32 = arith.constant 0 : i32
    %c0_i32_0 = arith.constant 0 : i32
    %c0_i32_1 = arith.constant 0 : i32
    return %c0_i32, %c0_i32_0 : i32, i32
  }
  func.func @transform_4(%arg0: i32) -> (i32, i32) {
    %c0_i32 = arith.constant 0 : i32
    %c0_i32_0 = arith.constant 0 : i32
    %c0_i32_1 = arith.constant 0 : i32
    return %c0_i32, %c0_i32_0 : i32, i32
  }
  func.func @transform_5(%arg0: i32) -> (i32, i32) {
    %c0_i32 = arith.constant 0 : i32
    %c0_i32_0 = arith.constant 0 : i32
    %c0_i32_1 = arith.constant 0 : i32
    return %c0_i32, %c0_i32_0 : i32, i32
  }
  func.func @transform_6(%arg0: i32) -> (i32, i32) {
    %c0_i32 = arith.constant 0 : i32
    %c0_i32_0 = arith.constant 0 : i32
    %c0_i32_1 = arith.constant 0 : i32
    return %c0_i32, %c0_i32_0 : i32, i32
  }
  func.func @transform_7(%arg0: i32) -> (i32, i32) {
    %c0_i32 = arith.constant 0 : i32
    %c0_i32_0 = arith.constant 0 : i32
    return %arg0, %c0_i32 : i32, i32
  }
}

</mosaic_0001>

<llo_original>
// kernel: generator_forward.1
$region0: #{generator_forward.1}
  #allocation0 [shape = 'u32[]', space=smem, size = 0x4, offset = 0x4, fixed_abs, tag = 'smem constant byte address 0x4 - core index']
  #allocation1 [shape = 'u32[144,128]{1,0:T(1,128)}', space=vmem, size = 0x12000, scoped, tag = 'internal scratch']
  %s0 = inlined_call_operand.vmem [shape: f32[8,100], index: 0, kind: input, shape index: {}]
  %s1 = inlined_call_operand.vmem [shape: f32[100,128], index: 1, kind: input, shape index: {}]
  %s2 = inlined_call_operand.vmem [shape: f32[1,128], index: 2, kind: input, shape index: {}]
  %s3 = inlined_call_operand.vmem [shape: f32[128,128], index: 3, kind: input, shape index: {}]
  %s4 = inlined_call_operand.vmem [shape: f32[1,128], index: 4, kind: input, shape index: {}]
  %s5 = inlined_call_operand.vmem [shape: f32[128,8], index: 5, kind: input, shape index: {}]
  %s6 = inlined_call_operand.vmem [shape: f32[1,8], index: 6, kind: input, shape index: {}]
  %s7 = inlined_call_operand.hbm [shape: f32[8,8], index: 7, kind: output, shape index: {}]
  %s8 = sld [smem:[#allocation0]]
  $region38: #{generator_forward.1} parent=0
    _
  %s10 = ssub.s32 1, %s8
  %s11 = scalar_select 0, %s10, %s8
  $region1: #{generator_forward.1} parent=0
    #allocation2 [shape = 'u8[4096]{0}', space=vmem, size = 0x1000, scoped, tag = 'output window, operand 0, single buffered']
    #allocation3 [shape = 's32[1]{0}', space=sflag, size = 0x4, scoped, tag = 'scoped memory for generator_forward.1']
    %12 = vsyncpa [#allocation3], 0
    // Predicated region
    $region2: #{generator_forward.1} parent=1 // pred_check
      _
    $region3: #{generator_forward.1} parent=1 // pred_check_branch
      %14 = sbr.rel (0) target = $region5
    $region4: #{generator_forward.1} parent=1 // pred_region
      _
    $region5: #{generator_forward.1} parent=1 // pred_fallthru
      _
    // Predicated region
    $region6: #{generator_forward.1} parent=1 // pred_check
      _
    $region7: #{generator_forward.1} parent=1 // pred_check_branch
      %16 = sbr.rel (0) target = $region9
    $region8: #{generator_forward.1} parent=1 // pred_region
      _
    $region9: #{generator_forward.1} parent=1 // pred_fallthru
      _
    // Predicated region
    $region10: #{generator_forward.1} parent=1 // pred_check
      _
    $region11: #{generator_forward.1} parent=1 // pred_check_branch
      %18 = sbr.rel (0) target = $region13
    $region12: #{generator_forward.1} parent=1 // pred_region
      _
    $region13: #{generator_forward.1} parent=1 // pred_fallthru
      _
    // Predicated region
    $region14: #{generator_forward.1} parent=1 // pred_check
      _
    $region15: #{generator_forward.1} parent=1 // pred_check_branch
      %20 = sbr.rel (0) target = $region17
    $region16: #{generator_forward.1} parent=1 // pred_region
      _
    $region17: #{generator_forward.1} parent=1 // pred_fallthru
      _
    // Predicated region
    $region18: #{generator_forward.1} parent=1 // pred_check
      _
    $region19: #{generator_forward.1} parent=1 // pred_check_branch
      %22 = sbr.rel (0) target = $region21
    $region20: #{generator_forward.1} parent=1 // pred_region
      _
    $region21: #{generator_forward.1} parent=1 // pred_fallthru
      _
    // Predicated region
    $region22: #{generator_forward.1} parent=1 // pred_check
      _
    $region23: #{generator_forward.1} parent=1 // pred_check_branch
      %24 = sbr.rel (0) target = $region25
    $region24: #{generator_forward.1} parent=1 // pred_region
      _
    $region25: #{generator_forward.1} parent=1 // pred_fallthru
      _
    // Predicated region
    $region26: #{generator_forward.1} parent=1 // pred_check
      _
    $region27: #{generator_forward.1} parent=1 // pred_check_branch
      %26 = sbr.rel (0) target = $region29
    $region28: #{generator_forward.1} parent=1 // pred_region
      _
    $region29: #{generator_forward.1} parent=1 // pred_fallthru
      _
    %v27 = vld [vmem:[%s0] sm:$0xff]
    %v28 = vld [vmem:[%s1] sm:$0xff]
    %v29 = vld [vmem:[%s1 + $0x8] sm:$0xff]
    %v30 = vld [vmem:[%s1 + $0x10] sm:$0xff]
    %v31 = vld [vmem:[%s1 + $0x18] sm:$0xff]
    %v32 = vld [vmem:[%s1 + $0x20] sm:$0xff]
    %v33 = vld [vmem:[%s1 + $0x28] sm:$0xff]
    %v34 = vld [vmem:[%s1 + $0x30] sm:$0xff]
    %v35 = vld [vmem:[%s1 + $0x38] sm:$0xff]
    %v36 = vld [vmem:[%s1 + $0x40] sm:$0xff]
    %v37 = vld [vmem:[%s1 + $0x48] sm:$0xff]
    %v38 = vld [vmem:[%s1 + $0x50] sm:$0xff]
    %v39 = vld [vmem:[%s1 + $0x58] sm:$0xff]
    %v40 = vld [vmem:[%s1 + $0x60] sm:$0xf]
    %v41 = vld [vmem:[%s2] sm:$0x1]
    %v43 = vlaneseq
    %v44 = vshrl.u32 %v43, 7
    %v45 = vsub.s32 0, %v44
    %v46 = vrot.slane %v41, %v45
    %vm48 = vcmask 818176
    %v50 = vsel %vm48, %v27, 0
    %vm52 = vcmask 1043456
    %v54 = vsel %vm52, %v40, 0
    %56 = vmatprep.subr.mxu0 0.0
    %57 = vmatpush1.msra.mxu0 %v28
    %58 = vmatprep.subr.mxu0 0.0
    %59 = vmatpush1.msra.mxu0 %v29
    %60 = vmatprep.subr.mxu0 0.0
    %61 = vmatpush1.msra.mxu0 %v30
    %62 = vmatprep.subr.mxu0 0.0
    %63 = vmatpush1.msra.mxu0 %v31
    %64 = vmatprep.subr.mxu0 0.0
    %65 = vmatpush1.msra.mxu0 %v32
    %66 = vmatprep.subr.mxu0 0.0
    %67 = vmatpush1.msra.mxu0 %v33
    %68 = vmatprep.subr.mxu0 0.0
    %69 = vmatpush1.msra.mxu0 %v34
    %70 = vmatprep.subr.mxu0 0.0
    %71 = vmatpush1.msra.mxu0 %v35
    %72 = vmatprep.subr.mxu0 0.0
    %73 = vmatpush1.msra.mxu0 %v36
    %74 = vmatprep.subr.mxu0 0.0
    %75 = vmatpush1.msra.mxu0 %v37
    %76 = vmatprep.subr.mxu0 0.0
    %77 = vmatpush1.msra.mxu0 %v38
    %78 = vmatprep.subr.mxu0 0.0
    %79 = vmatpush1.msra.mxu0 %v39
    %80 = vmatprep.subr.mxu0 0.0
    %81 = vmatpush1.msra.mxu0 %v54
    %82 = vmatprep.subr.mxu0 0.0
    %83 = vmatpush1.msra.mxu0 0.0
    %84 = vmatprep.subr.mxu0 0.0
    %85 = vmatpush1.msra.mxu0 0.0
    %86 = vmatprep.subr.mxu0 0.0
    %87 = vmatpush1.msra.mxu0 0.0
    %88 = vmatprep.subr.mxu0 0.0
    %89 = vmatpush1.msra.mxu0 0.0
    %90 = vmatprep.subr.mxu0 0.0
    %91 = vmatpush1.msra.mxu0 0.0
    %92 = vmatprep.subr.mxu0 0.0
    %93 = vmatpush1.msra.mxu0 0.0
    %94 = vmatprep.subr.mxu0 0.0
    %95 = vmatpush1.msra.mxu0 0.0
    %96 = vmatprep.subr.mxu0 0.0
    %97 = vmatpush1.msra.mxu0 0.0
    %98 = vmatprep.subr.mxu0 0.0
    %99 = vmatpush1.msra.mxu0 0.0
    %100 = vmatprep.subr.mxu0 0.0
    %101 = vmatpush1.msra.mxu0 0.0
    %102 = vmatprep.subr.mxu0 0.0
    %103 = vmatpush1.msra.mxu0 0.0
    %104 = vmatprep.subr.mxu0 0.0
    %105 = vmatpush1.msra.mxu0 0.0
    %106 = vmatprep.subr.mxu0 0.0
    %107 = vmatpush1.msra.mxu0 0.0
    %108 = vmatprep.subr.mxu0 0.0
    %109 = vmatpush1.msra.mxu0 0.0
    %110 = vmatprep.subr.mxu0 0.0
    %111 = vmatpush1.msra.mxu0 0.0
    %112 = vmatprep.subr.mxu0 0.0
    %113 = vmatpush1.msra.mxu0 0.0
    %114 = vmatprep.subr.mxu0 0.0
    %115 = vmatpush1.msra.mxu0 0.0
    %116 = vmatprep.subr.mxu0 0.0
    %117 = vmatpush1.msra.mxu0 0.0
    %118 = vmatprep.subr.mxu0 0.0
    %119 = vmatpush1.msra.mxu0 0.0
    %120 = vmatprep.mubr.f32.mxu0 0.0
    %121 = vmatmul.mubr.f32.gmra.mrb[0].mxu0 %v50
    %v122 = vpop.f32.mrb[0].mxu0
    %v123 = vadd.f32 %v46, %v122
    %v124 = vpop.f32.mrb[0].mxu0
    %125 = vdwg.mxu0
    %v126 = vmax.f32 %v123, 0.0
    %v127 = vld [vmem:[%s3] sm:$0xff]
    %v128 = vld [vmem:[%s3 + $0x8] sm:$0xff]
    %v129 = vld [vmem:[%s3 + $0x10] sm:$0xff]
    %v130 = vld [vmem:[%s3 + $0x18] sm:$0xff]
    %v131 = vld [vmem:[%s3 + $0x20] sm:$0xff]
    %v132 = vld [vmem:[%s3 + $0x28] sm:$0xff]
    %v133 = vld [vmem:[%s3 + $0x30] sm:$0xff]
    %v134 = vld [vmem:[%s3 + $0x38] sm:$0xff]
    %v135 = vld [vmem:[%s3 + $0x40] sm:$0xff]
    %v136 = vld [vmem:[%s3 + $0x48] sm:$0xff]
    %v137 = vld [vmem:[%s3 + $0x50] sm:$0xff]
    %v138 = vld [vmem:[%s3 + $0x58] sm:$0xff]
    %v139 = vld [vmem:[%s3 + $0x60] sm:$0xff]
    %v140 = vld [vmem:[%s3 + $0x68] sm:$0xff]
    %v141 = vld [vmem:[%s3 + $0x70] sm:$0xff]
    %v142 = vld [vmem:[%s3 + $0x78] sm:$0xff]
    %v143 = vld [vmem:[%s4] sm:$0x1]
    %v145 = vlaneseq
    %v146 = vshrl.u32 %v145, 7
    %v147 = vsub.s32 0, %v146
    %v148 = vrot.slane %v143, %v147
    %150 = vmatprep.subr.mxu0 0.0
    %151 = vmatpush1.msra.mxu0 %v127
    %152 = vmatprep.subr.mxu0 0.0
    %153 = vmatpush1.msra.mxu0 %v128
    %154 = vmatprep.subr.mxu0 0.0
    %155 = vmatpush1.msra.mxu0 %v129
    %156 = vmatprep.subr.mxu0 0.0
    %157 = vmatpush1.msra.mxu0 %v130
    %158 = vmatprep.subr.mxu0 0.0
    %159 = vmatpush1.msra.mxu0 %v131
    %160 = vmatprep.subr.mxu0 0.0
    %161 = vmatpush1.msra.mxu0 %v132
    %162 = vmatprep.subr.mxu0 0.0
    %163 = vmatpush1.msra.mxu0 %v133
    %164 = vmatprep.subr.mxu0 0.0
    %165 = vmatpush1.msra.mxu0 %v134
    %166 = vmatprep.subr.mxu0 0.0
    %167 = vmatpush1.msra.mxu0 %v135
    %168 = vmatprep.subr.mxu0 0.0
    %169 = vmatpush1.msra.mxu0 %v136
    %170 = vmatprep.subr.mxu0 0.0
    %171 = vmatpush1.msra.mxu0 %v137
    %172 = vmatprep.subr.mxu0 0.0
    %173 = vmatpush1.msra.mxu0 %v138
    %174 = vmatprep.subr.mxu0 0.0
    %175 = vmatpush1.msra.mxu0 %v139
    %176 = vmatprep.subr.mxu0 0.0
    %177 = vmatpush1.msra.mxu0 %v140
    %178 = vmatprep.subr.mxu0 0.0
    %179 = vmatpush1.msra.mxu0 %v141
    %180 = vmatprep.subr.mxu0 0.0
    %181 = vmatpush1.msra.mxu0 %v142
    %182 = vmatprep.subr.mxu0 0.0
    %183 = vmatpush1.msra.mxu0 0.0
    %184 = vmatprep.subr.mxu0 0.0
    %185 = vmatpush1.msra.mxu0 0.0
    %186 = vmatprep.subr.mxu0 0.0
    %187 = vmatpush1.msra.mxu0 0.0
    %188 = vmatprep.subr.mxu0 0.0
    %189 = vmatpush1.msra.mxu0 0.0
    %190 = vmatprep.subr.mxu0 0.0
    %191 = vmatpush1.msra.mxu0 0.0
    %192 = vmatprep.subr.mxu0 0.0
    %193 = vmatpush1.msra.mxu0 0.0
    %194 = vmatprep.subr.mxu0 0.0
    %195 = vmatpush1.msra.mxu0 0.0
    %196 = vmatprep.subr.mxu0 0.0
    %197 = vmatpush1.msra.mxu0 0.0
    %198 = vmatprep.subr.mxu0 0.0
    %199 = vmatpush1.msra.mxu0 0.0
    %200 = vmatprep.subr.mxu0 0.0
    %201 = vmatpush1.msra.mxu0 0.0
    %202 = vmatprep.subr.mxu0 0.0
    %203 = vmatpush1.msra.mxu0 0.0
    %204 = vmatprep.subr.mxu0 0.0
    %205 = vmatpush1.msra.mxu0 0.0
    %206 = vmatprep.subr.mxu0 0.0
    %207 = vmatpush1.msra.mxu0 0.0
    %208 = vmatprep.subr.mxu0 0.0
    %209 = vmatpush1.msra.mxu0 0.0
    %210 = vmatprep.subr.mxu0 0.0
    %211 = vmatpush1.msra.mxu0 0.0
    %212 = vmatprep.subr.mxu0 0.0
    %213 = vmatpush1.msra.mxu0 0.0
    %214 = vmatprep.mubr.f32.mxu0 0.0
    %215 = vmatmul.mubr.f32.gmra.mrb[0].mxu0 %v126
    %v216 = vpop.f32.mrb[0].mxu0
    %v217 = vadd.f32 %v148, %v216
    %v218 = vpop.f32.mrb[0].mxu0
    %219 = vdwg.mxu0
    %v220 = vmax.f32 %v217, 0.0
    %v221 = vld [vmem:[%s5] sm:$0xff]
    %v222 = vld [vmem:[%s5 + $0x8] sm:$0xff]
    %v223 = vld [vmem:[%s5 + $0x10] sm:$0xff]
    %v224 = vld [vmem:[%s5 + $0x18] sm:$0xff]
    %v225 = vld [vmem:[%s5 + $0x20] sm:$0xff]
    %v226 = vld [vmem:[%s5 + $0x28] sm:$0xff]
    %v227 = vld [vmem:[%s5 + $0x30] sm:$0xff]
    %v228 = vld [vmem:[%s5 + $0x38] sm:$0xff]
    %v229 = vld [vmem:[%s5 + $0x40] sm:$0xff]
    %v230 = vld [vmem:[%s5 + $0x48] sm:$0xff]
    %v231 = vld [vmem:[%s5 + $0x50] sm:$0xff]
    %v232 = vld [vmem:[%s5 + $0x58] sm:$0xff]
    %v233 = vld [vmem:[%s5 + $0x60] sm:$0xff]
    %v234 = vld [vmem:[%s5 + $0x68] sm:$0xff]
    %v235 = vld [vmem:[%s5 + $0x70] sm:$0xff]
    %v236 = vld [vmem:[%s5 + $0x78] sm:$0xff]
    %v237 = vld [vmem:[%s6] sm:$0x1]
    %v239 = vlaneseq
    %v240 = vshrl.u32 %v239, 7
    %v241 = vsub.s32 0, %v240
    %v242 = vrot.slane %v237, %v241
    %244 = vmatprep.subr.mxu0 0.0
    %245 = vmatpush1.msra.mxu0 %v221
    %246 = vmatprep.subr.mxu0 0.0
    %247 = vmatpush1.msra.mxu0 %v222
    %248 = vmatprep.subr.mxu0 0.0
    %249 = vmatpush1.msra.mxu0 %v223
    %250 = vmatprep.subr.mxu0 0.0
    %251 = vmatpush1.msra.mxu0 %v224
    %252 = vmatprep.subr.mxu0 0.0
    %253 = vmatpush1.msra.mxu0 %v225
    %254 = vmatprep.subr.mxu0 0.0
    %255 = vmatpush1.msra.mxu0 %v226
    %256 = vmatprep.subr.mxu0 0.0
    %257 = vmatpush1.msra.mxu0 %v227
    %258 = vmatprep.subr.mxu0 0.0
    %259 = vmatpush1.msra.mxu0 %v228
    %260 = vmatprep.subr.mxu0 0.0
    %261 = vmatpush1.msra.mxu0 %v229
    %262 = vmatprep.subr.mxu0 0.0
    %263 = vmatpush1.msra.mxu0 %v230
    %264 = vmatprep.subr.mxu0 0.0
    %265 = vmatpush1.msra.mxu0 %v231
    %266 = vmatprep.subr.mxu0 0.0
    %267 = vmatpush1.msra.mxu0 %v232
    %268 = vmatprep.subr.mxu0 0.0
    %269 = vmatpush1.msra.mxu0 %v233
    %270 = vmatprep.subr.mxu0 0.0
    %271 = vmatpush1.msra.mxu0 %v234
    %272 = vmatprep.subr.mxu0 0.0
    %273 = vmatpush1.msra.mxu0 %v235
    %274 = vmatprep.subr.mxu0 0.0
    %275 = vmatpush1.msra.mxu0 %v236
    %276 = vmatprep.subr.mxu0 0.0
    %277 = vmatpush1.msra.mxu0 0.0
    %278 = vmatprep.subr.mxu0 0.0
    %279 = vmatpush1.msra.mxu0 0.0
    %280 = vmatprep.subr.mxu0 0.0
    %281 = vmatpush1.msra.mxu0 0.0
    %282 = vmatprep.subr.mxu0 0.0
    %283 = vmatpush1.msra.mxu0 0.0
    %284 = vmatprep.subr.mxu0 0.0
    %285 = vmatpush1.msra.mxu0 0.0
    %286 = vmatprep.subr.mxu0 0.0
    %287 = vmatpush1.msra.mxu0 0.0
    %288 = vmatprep.subr.mxu0 0.0
    %289 = vmatpush1.msra.mxu0 0.0
    %290 = vmatprep.subr.mxu0 0.0
    %291 = vmatpush1.msra.mxu0 0.0
    %292 = vmatprep.subr.mxu0 0.0
    %293 = vmatpush1.msra.mxu0 0.0
    %294 = vmatprep.subr.mxu0 0.0
    %295 = vmatpush1.msra.mxu0 0.0
    %296 = vmatprep.subr.mxu0 0.0
    %297 = vmatpush1.msra.mxu0 0.0
    %298 = vmatprep.subr.mxu0 0.0
    %299 = vmatpush1.msra.mxu0 0.0
    %300 = vmatprep.subr.mxu0 0.0
    %301 = vmatpush1.msra.mxu0 0.0
    %302 = vmatprep.subr.mxu0 0.0
    %303 = vmatpush1.msra.mxu0 0.0
    %304 = vmatprep.subr.mxu0 0.0
    %305 = vmatpush1.msra.mxu0 0.0
    %306 = vmatprep.subr.mxu0 0.0
    %307 = vmatpush1.msra.mxu0 0.0
    %308 = vmatprep.mubr.f32.mxu0 0.0
    %309 = vmatmul.mubr.f32.gmra.mrb[0].mxu0 %v220
    %v310 = vpop.f32.mrb[0].mxu0
    %v311 = vadd.f32 %v242, %v310
    %v312 = vpop.f32.mrb[0].mxu0
    %313 = vdwg.mxu0
    %vm314 = vcmask 64512
    %315 = vst.msk [vmem:[#allocation2] sm:$0xff] %vm314, %v311
    // Predicated region
    $region30: #{generator_forward.1} parent=1 // pred_check
      _
    $region31: #{generator_forward.1} parent=1 // pred_check_branch
      %317 = sbr.rel (0) target = $region33
    $region32: #{generator_forward.1} parent=1 // pred_region
      %s319 = ssub.s32 128, 128
      %320 = vsyncadd [#allocation3], %s319
      %s322 = sshll.u32 [#allocation2], 4
      %s323 = int_to_ptr.vmem [resolvable:$true] %s322
      %325 = dma.vmem_to_hbm [thread:$0]  %s323, 128, %s7, [#allocation3]
    $region33: #{generator_forward.1} parent=1 // pred_fallthru
      _
    // Predicated region
    $region34: #{generator_forward.1} parent=1 // pred_check
      _
    $region35: #{generator_forward.1} parent=1 // pred_check_branch
      %327 = sbr.rel (0) target = $region37
    $region36: #{generator_forward.1} parent=1 // pred_region
      %328 = dma.done [#allocation3], 128
    $region37: #{generator_forward.1} parent=1 // pred_fallthru
      _
    %329 = vsyncpa [#allocation3], 1

</llo_original>
